<compile_context>
chip_gen: v7x
topology: tpu7x:2x2x1
jax: 0.10.0
libtpu: 0.0.40
codegen_flags: <defaults>
</compile_context>

<pallas_src>
import jax
import jax.numpy as jnp
from jax.experimental import pallas as pl
from jax.experimental.pallas import tpu as pltpu

# ----------------------- synthetic feature map -----------------------
EMBEDDING_DIM = 32
FEATURES = [
    ("user_id",  {"type": "categorical", "vocab_size": 20}),
    ("item_id",  {"type": "categorical", "vocab_size": 30}),
    ("category", {"type": "categorical", "vocab_size": 10}),
    ("price",    {"type": "numeric"}),
]

CAT_FEATURES = [(i, n, s) for i, (n, s) in enumerate(FEATURES) if s["type"] == "categorical"]
NUM_FEATURES = [(i, n, s) for i, (n, s) in enumerate(FEATURES) if s["type"] == "numeric"]

F_TOTAL = len(FEATURES)
F_CAT = len(CAT_FEATURES)
F_NUM = len(NUM_FEATURES)

# row offsets of each categorical feature inside the packed table
CAT_OFFSETS = []
_off = 0
for _, _, spec in CAT_FEATURES:
    CAT_OFFSETS.append(_off)
    _off += spec["vocab_size"]
V_TOTAL = _off

CAT_POS = [pos for pos, _, _ in CAT_FEATURES]   # output slot (feature axis) of each cat feat
NUM_POS = [pos for pos, _, _ in NUM_FEATURES]   # output slot of each numeric feat

D = EMBEDDING_DIM
OUT_W = F_TOTAL * D                             # 128 -> one full vreg lane row

NUM_ROW_BASE = V_TOTAL                          # numeric feature j lives at combined row V_TOTAL + j
K_RAW = V_TOTAL + F_NUM                         # 61
K_PAD = max(128, ((K_RAW + 127) // 128) * 128)  # 128 -> full-lane contraction dim


# ------------------ combined weight (host-side assembly) --------------
def build_combined_weight(table, num_w):
    """Pack per-feature embedding tables + numeric Linear rows into W_comb[K_PAD, OUT_W].

    Column block pos*D:(pos+1)*D belongs to the feature at output slot `pos`.
    Rows CAT_OFFSETS[f] .. CAT_OFFSETS[f]+vocab_f-1 carry feature f's table;
    row NUM_ROW_BASE + j carries numeric feature j's Linear(1, D) weight row.
    """
    assert table.shape == (V_TOTAL, D)
    assert num_w.shape == (F_NUM, D)
    w = jnp.zeros((K_PAD, OUT_W), jnp.float32)
    for f in range(F_CAT):
        pos = CAT_POS[f]
        off = CAT_OFFSETS[f]
        vocab = CAT_FEATURES[f][2]["vocab_size"]
        w = w.at[off:off + vocab, pos * D:(pos + 1) * D].set(table[off:off + vocab])
    for j in range(F_NUM):
        pos = NUM_POS[j]
        w = w.at[NUM_ROW_BASE + j, pos * D:(pos + 1) * D].set(num_w[j])
    return w


# ----------------------------- kernel --------------------------------
def feature_embedding_kernel(cat_idx_ref, num_x_ref, w_comb_ref, out_ref):
    """One batch tile of TB rows per grid step.

    cat_idx_ref : VMEM [TB, F_CAT]     int32
    num_x_ref   : VMEM [TB, F_NUM]     float32
    w_comb_ref  : VMEM [K_PAD, OUT_W]  float32  (combined weight, grid-invariant)
    out_ref     : VMEM [TB, OUT_W]     float32  (lane-dense 128-wide slab)
    """
    tb = out_ref.shape[0]

    cat_idx = cat_idx_ref[...]        # [TB, F_CAT]
    num_x = num_x_ref[...]            # [TB, F_NUM]
    w_comb = w_comb_ref[...]          # [K_PAD, OUT_W]  (loaded once per tile)

    # combined activation: disjoint one-hots for categorical features, raw
    # numeric value placed in its own row of the contraction dimension.
    col_ids = jax.lax.broadcasted_iota(jnp.int32, (tb, K_PAD), 1)

    act = jnp.zeros((tb, K_PAD), jnp.float32)
    for f in range(F_CAT):
        idx = cat_idx[:, f:f + 1] + CAT_OFFSETS[f]              # [TB, 1]
        act = act + (col_ids == idx).astype(jnp.float32)        # disjoint ranges
    for j in range(F_NUM):
        act = jnp.where(col_ids == NUM_ROW_BASE + j, num_x[:, j:j + 1], act)

    # single MXU matmul -> single unmasked 128-lane store per batch tile
    out_ref[...] = jnp.dot(act, w_comb, preferred_element_type=jnp.float32)


def feature_embedding(cat_idx, num_x, w_comb, *, batch_tile=1024):
    """cat_idx: [B, F_CAT] int32; num_x: [B, F_NUM] f32 -> [B, F_TOTAL, D] f32."""
    B = cat_idx.shape[0]
    assert cat_idx.shape == (B, F_CAT)
    assert num_x.shape == (B, F_NUM)
    assert w_comb.shape == (K_PAD, OUT_W)

    # Tile selection: big tiles amortize the ~0.35 us/step pipeline overhead;
    # when B allows, use >=2 tiles so the "parallel" batch axis feeds both
    # TensorCores on v7x.  Sublane dim kept a multiple of 8.
    if B >= 2 * batch_tile:
        TB = batch_tile
    elif B > 8:
        TB = min(batch_tile, max(8, ((-(-B // 2)) + 7) // 8 * 8))
    else:
        TB = 8
    num_tiles = pl.cdiv(B, TB)

    grid_spec = pltpu.PrefetchScalarGridSpec(
        num_scalar_prefetch=0,
        grid=(num_tiles,),
        in_specs=[
            pl.BlockSpec((TB, F_CAT), lambda b: (b, 0)),      # categorical indices
            pl.BlockSpec((TB, F_NUM), lambda b: (b, 0)),      # numeric raw values
            pl.BlockSpec((K_PAD, OUT_W), lambda b: (0, 0)),   # combined weight (invariant)
        ],
        out_specs=pl.BlockSpec((TB, OUT_W), lambda b: (b, 0)),
    )
    # No wrapper-side pad/slice: Pallas clips the ragged last tile; OOB input
    # rows only feed discarded output rows (the gather is a compare, not a load).
    out_flat = pl.pallas_call(
        feature_embedding_kernel,
        grid_spec=grid_spec,
        out_shape=jax.ShapeDtypeStruct((B, OUT_W), jnp.float32),
        compiler_params=pltpu.CompilerParams(
            dimension_semantics=("parallel",),   # independent batch tiles -> v7x megacore
        ),
    )(cat_idx, num_x, w_comb)

    # [B, F*D] -> [B, F, D]  (matches torch.stack(dim=1)); metadata-only reshape.
    return out_flat.reshape(B, F_TOTAL, D)


# --------------------------- reference --------------------------------
def feature_embedding_ref(cat_idx, num_x, table, num_w):
    out = [None] * F_TOTAL
    for f in range(F_CAT):
        out[CAT_POS[f]] = table[CAT_OFFSETS[f] + cat_idx[:, f]]          # [B, D]
    for j in range(F_NUM):
        out[NUM_POS[j]] = num_x[:, j:j + 1] * num_w[j][None]             # [B, D]
    return jnp.stack(out, axis=1)                                         # [B, F, D]


# ----------------------------- main -----------------------------------
if __name__ == "__main__":
    key = jax.random.PRNGKey(0)
    k_tbl, k_numw, k_idx, k_num = jax.random.split(key, 4)

    # deterministic parameter init (module default: normal_(std=1e-4) for embeddings)
    table = (1e-4 * jax.random.normal(k_tbl, (V_TOTAL, D))).astype(jnp.float32)
    # numeric Linear(1, D, bias=False): torch weight [D, 1]; stored here as [F_NUM, D] rows
    num_w = (0.1 * jax.random.normal(k_numw, (F_NUM, D))).astype(jnp.float32)
    w_comb = build_combined_weight(table, num_w)

    def make_inputs(batch, seed):
        kk = jax.random.fold_in(k_idx, seed)
        c = jnp.stack(
            [jax.random.randint(jax.random.fold_in(kk, i), (batch,), 0, spec["vocab_size"])
             for i, (_, _, spec) in enumerate(CAT_FEATURES)],
            axis=1,
        ).astype(jnp.int32)                                              # [B, F_CAT]
        n = jax.random.normal(jax.random.fold_in(k_num, seed),
                              (batch, F_NUM)).astype(jnp.float32)        # [B, F_NUM]
        return c, n

    # small single-tile case
    B0 = 8
    cat_idx, num_x = make_inputs(B0, 0)
    out = jax.block_until_ready(feature_embedding(cat_idx, num_x, w_comb))
    ref = feature_embedding_ref(cat_idx, num_x, table, num_w)
    assert out.shape == (B0, F_TOTAL, D), out.shape
    assert jnp.allclose(out, ref, atol=1e-6, rtol=1e-3), "mismatch vs reference (B=8)"

    # multi-tile + ragged-last-tile case (exercises pipeline and clipping)
    B1 = 200
    cat_idx, num_x = make_inputs(B1, 1)
    out = jax.block_until_ready(feature_embedding(cat_idx, num_x, w_comb, batch_tile=64))
    ref = feature_embedding_ref(cat_idx, num_x, table, num_w)
    assert out.shape == (B1, F_TOTAL, D), out.shape
    assert jnp.allclose(out, ref, atol=1e-6, rtol=1e-3), "mismatch vs reference (B=200)"

    print("KERNEL_OK")
</pallas_src>

<mosaic_0001>
module attributes {stable_mosaic.version = 11 : i64} {
  func.func @feature_embedding_kernel(%arg0: i32, %arg1: memref<8x3xi32, #tpu.memory_space<vmem>>, %arg2: memref<8x1xf32, #tpu.memory_space<vmem>>, %arg3: memref<128x128xf32, #tpu.memory_space<vmem>>, %arg4: memref<8x128xf32, #tpu.memory_space<vmem>>) attributes {dimension_semantics = [#tpu.dimension_semantics<parallel>], iteration_bounds = array<i64: 1>, scalar_prefetch = 0 : i64, scratch_operands = 0 : i64, tpu.core_type = #tpu.core_type<tc>, window_params = [{transform_indices = @transform_0, window_bounds = array<i64: 8, 3>}, {transform_indices = @transform_1, window_bounds = array<i64: 8, 1>}, {pipeline_mode = #tpu.pipeline_mode<synchronous>, transform_indices = @transform_2, window_bounds = array<i64: 128, 128>}, {transform_indices = @transform_3, window_bounds = array<i64: 8, 128>}]} {
    %c0 = arith.constant 0 : index
    %c0_0 = arith.constant 0 : index
    %0 = vector.load %arg1[%c0, %c0_0] : memref<8x3xi32, #tpu.memory_space<vmem>>, vector<8x3xi32>
    %c0_1 = arith.constant 0 : index
    %c0_2 = arith.constant 0 : index
    %1 = vector.load %arg2[%c0_1, %c0_2] : memref<8x1xf32, #tpu.memory_space<vmem>>, vector<8x1xf32>
    %c0_3 = arith.constant 0 : index
    %c0_4 = arith.constant 0 : index
    %2 = vector.load %arg3[%c0_3, %c0_4] : memref<128x128xf32, #tpu.memory_space<vmem>>, vector<128x128xf32>
    %3 = tpu.iota {dimensions = array<i32: 1>} : vector<8x128xi32>
    %cst = arith.constant 0.000000e+00 : f32
    %4 = vector.broadcast %cst : f32 to vector<8x128xf32>
    %5 = vector.extract_strided_slice %0 {offsets = [0, 0], sizes = [8, 1], strides = [1, 1]} : vector<8x3xi32> to vector<8x1xi32>
    %c0_i32 = arith.constant 0 : i32
    %6 = vector.broadcast %c0_i32 : i32 to vector<8x1xi32>
    %7 = arith.addi %5, %6 : vector<8x1xi32>
    %8 = vector.broadcast %7 : vector<8x1xi32> to vector<8x128xi32>
    %9 = arith.cmpi eq, %3, %8 : vector<8x128xi32>
    %10 = arith.extui %9 : vector<8x128xi1> to vector<8x128xi32>
    %11 = arith.sitofp %10 : vector<8x128xi32> to vector<8x128xf32>
    %12 = arith.addf %4, %11 : vector<8x128xf32>
    %13 = vector.extract_strided_slice %0 {offsets = [0, 1], sizes = [8, 1], strides = [1, 1]} : vector<8x3xi32> to vector<8x1xi32>
    %c20_i32 = arith.constant 20 : i32
    %14 = vector.broadcast %c20_i32 : i32 to vector<8x1xi32>
    %15 = arith.addi %13, %14 : vector<8x1xi32>
    %16 = vector.broadcast %15 : vector<8x1xi32> to vector<8x128xi32>
    %17 = arith.cmpi eq, %3, %16 : vector<8x128xi32>
    %18 = arith.extui %17 : vector<8x128xi1> to vector<8x128xi32>
    %19 = arith.sitofp %18 : vector<8x128xi32> to vector<8x128xf32>
    %20 = arith.addf %12, %19 : vector<8x128xf32>
    %21 = vector.extract_strided_slice %0 {offsets = [0, 2], sizes = [8, 1], strides = [1, 1]} : vector<8x3xi32> to vector<8x1xi32>
    %c50_i32 = arith.constant 50 : i32
    %22 = vector.broadcast %c50_i32 : i32 to vector<8x1xi32>
    %23 = arith.addi %21, %22 : vector<8x1xi32>
    %24 = vector.broadcast %23 : vector<8x1xi32> to vector<8x128xi32>
    %25 = arith.cmpi eq, %3, %24 : vector<8x128xi32>
    %26 = arith.extui %25 : vector<8x128xi1> to vector<8x128xi32>
    %27 = arith.sitofp %26 : vector<8x128xi32> to vector<8x128xf32>
    %28 = arith.addf %20, %27 : vector<8x128xf32>
    %c60_i32 = arith.constant 60 : i32
    %29 = vector.broadcast %c60_i32 : i32 to vector<8x128xi32>
    %30 = arith.cmpi eq, %3, %29 : vector<8x128xi32>
    %31 = vector.shape_cast %1 : vector<8x1xf32> to vector<8x1xf32>
    %32 = vector.broadcast %31 : vector<8x1xf32> to vector<8x128xf32>
    %33 = arith.select %30, %32, %28 : vector<8x128xi1>, vector<8x128xf32>
    %cst_5 = arith.constant dense<0.000000e+00> : vector<8x128xf32>
    %34 = tpu.matmul %33, %2, %cst_5 {dimension_numbers = #tpu.dot_dimension_numbers<[1], [0], [0], [1], [0, 0, 1, 1], [], []>} : vector<8x128xf32>, vector<128x128xf32>, vector<8x128xf32> -> vector<8x128xf32>
    %c0_6 = arith.constant 0 : index
    %c0_7 = arith.constant 0 : index
    %35 = vector.load %arg4[%c0_6, %c0_7] : memref<8x128xf32, #tpu.memory_space<vmem>>, vector<8x128xf32>
    tpu.vector_store %arg4[%c0_6, %c0_7], %34 {strides = array<i32>} : memref<8x128xf32, #tpu.memory_space<vmem>>, vector<8x128xf32>,
    return
  }
  func.func @transform_0(%arg0: i32) -> (i32, i32) {
    %c0_i32 = arith.constant 0 : i32
    %c0_i32_0 = arith.constant 0 : i32
    return %arg0, %c0_i32 : i32, i32
  }
  func.func @transform_1(%arg0: i32) -> (i32, i32) {
    %c0_i32 = arith.constant 0 : i32
    %c0_i32_0 = arith.constant 0 : i32
    return %arg0, %c0_i32 : i32, i32
  }
  func.func @transform_2(%arg0: i32) -> (i32, i32) {
    %c0_i32 = arith.constant 0 : i32
    %c0_i32_0 = arith.constant 0 : i32
    %c0_i32_1 = arith.constant 0 : i32
    return %c0_i32, %c0_i32_0 : i32, i32
  }
  func.func @transform_3(%arg0: i32) -> (i32, i32) {
    %c0_i32 = arith.constant 0 : i32
    %c0_i32_0 = arith.constant 0 : i32
    return %arg0, %c0_i32 : i32, i32
  }
}

</mosaic_0001>

<llo_original>
// kernel: tpu_custom_call.1
$region0: #{tpu_custom_call.1}
  #allocation0 [shape = 'u32[]', space=smem, size = 0x4, offset = 0x4, fixed_abs, tag = 'smem constant byte address 0x4 - core index']
  #allocation1 [shape = 'u32[144,128]{1,0:T(1,128)}', space=vmem, size = 0x12000, scoped, tag = 'internal scratch']
  %s0 = inlined_call_operand.vmem [shape: s32[8,3], index: 0, kind: input, shape index: {}]
  %s1 = inlined_call_operand.vmem [shape: f32[8,1], index: 1, kind: input, shape index: {}]
  %s2 = inlined_call_operand.hbm [shape: f32[128,128], index: 2, kind: input, shape index: {}]
  %s3 = inlined_call_operand.hbm [shape: f32[8,128], index: 3, kind: output, shape index: {}]
  %s4 = sld [smem:[#allocation0]]
  $region26: #{tpu_custom_call.1} parent=0
    _
  %s6 = ssub.s32 1, %s4
  %s7 = scalar_select 0, %s6, %s4
  $region1: #{tpu_custom_call.1} parent=0
    #allocation2 [shape = 'u8[65536]{0}', space=vmem, size = 0x10000, scoped, tag = 'input window, operand 2, single buffered']
    #allocation3 [shape = 's32[1]{0}', space=sflag, size = 0x4, scoped, tag = 'scoped memory for tpu_custom_call.1']
    #allocation4 [shape = 's32[1]{0}', space=sflag, size = 0x4, scoped, tag = 'scoped memory for tpu_custom_call.1']
    #allocation5 [shape = 'u8[4096]{0}', space=vmem, size = 0x1000, scoped, tag = 'output window, operand 0, single buffered']
    %8 = vsyncpa [#allocation3], 0
    %9 = vsyncpa [#allocation4], 0
    // Predicated region
    $region2: #{tpu_custom_call.1} parent=1 // pred_check
      _
    $region3: #{tpu_custom_call.1} parent=1 // pred_check_branch
      %11 = sbr.rel (0) target = $region5
    $region4: #{tpu_custom_call.1} parent=1 // pred_region
      _
    $region5: #{tpu_custom_call.1} parent=1 // pred_fallthru
      _
    // Predicated region
    $region6: #{tpu_custom_call.1} parent=1 // pred_check
      _
    $region7: #{tpu_custom_call.1} parent=1 // pred_check_branch
      %13 = sbr.rel (0) target = $region9
    $region8: #{tpu_custom_call.1} parent=1 // pred_region
      _
    $region9: #{tpu_custom_call.1} parent=1 // pred_fallthru
      _
    // Predicated region
    $region10: #{tpu_custom_call.1} parent=1 // pred_check
      _
    $region11: #{tpu_custom_call.1} parent=1 // pred_check_branch
      %15 = sbr.rel (0) target = $region13
    $region12: #{tpu_custom_call.1} parent=1 // pred_region
      %s17 = ssub.s32 2048, 2048
      %18 = vsyncadd [#allocation3], %s17
      %s19 = sshll.u32 [#allocation2], 4
      %s20 = int_to_ptr.vmem [resolvable:$true] %s19
      %25 = dma.hbm_to_vmem [thread:$0]  %s2, 2048, %s20, [#allocation3], 128, 128, 8
    $region13: #{tpu_custom_call.1} parent=1 // pred_fallthru
      _
    // Predicated region
    $region14: #{tpu_custom_call.1} parent=1 // pred_check
      _
    $region15: #{tpu_custom_call.1} parent=1 // pred_check_branch
      %27 = sbr.rel (0) target = $region17
    $region16: #{tpu_custom_call.1} parent=1 // pred_region
      %28 = dma.done [#allocation3], 2048
    $region17: #{tpu_custom_call.1} parent=1 // pred_fallthru
      _
    %v29 = vld [vmem:[%s0] sm:$0xff]
    %v30 = vld [vmem:[%s1] sm:$0xff]
    %v31 = vld [vmem:[#allocation2] sm:$0xff]
    %v32 = vld [vmem:[#allocation2 + $0x8] sm:$0xff]
    %v33 = vld [vmem:[#allocation2 + $0x10] sm:$0xff]
    %v34 = vld [vmem:[#allocation2 + $0x18] sm:$0xff]
    %v35 = vld [vmem:[#allocation2 + $0x20] sm:$0xff]
    %v36 = vld [vmem:[#allocation2 + $0x28] sm:$0xff]
    %v37 = vld [vmem:[#allocation2 + $0x30] sm:$0xff]
    %v38 = vld [vmem:[#allocation2 + $0x38] sm:$0xff]
    %v39 = vld [vmem:[#allocation2 + $0x40] sm:$0xff]
    %v40 = vld [vmem:[#allocation2 + $0x48] sm:$0xff]
    %v41 = vld [vmem:[#allocation2 + $0x50] sm:$0xff]
    %v42 = vld [vmem:[#allocation2 + $0x58] sm:$0xff]
    %v43 = vld [vmem:[#allocation2 + $0x60] sm:$0xff]
    %v44 = vld [vmem:[#allocation2 + $0x68] sm:$0xff]
    %v45 = vld [vmem:[#allocation2 + $0x70] sm:$0xff]
    %v46 = vld [vmem:[#allocation2 + $0x78] sm:$0xff]
    %v47 = vlaneseq
    %v48 = vand.u32 %v47, 127
    %49 = vset.pattern.permute.xlu0 0
    %50 = vperm.xlu0 %49, %v29
    %v51 = vpop.permute.xlu0 %50
    %vm52 = vcmp.eq.s32.totalorder %v48, %v51
    %v53 = vsel %vm52, 1, 0
    %v54 = vcvt.s32.f32 %v53
    %v55 = vadd.f32 %v54, 0.0
    %v56 = vadd.s32 %v29, 20
    %57 = vset.pattern.permute.xlu0 1
    %58 = vperm.xlu0 %57, %v56
    %v59 = vpop.permute.xlu0 %58
    %vm60 = vcmp.eq.s32.totalorder %v48, %v59
    %v61 = vsel %vm60, 1, 0
    %v62 = vcvt.s32.f32 %v61
    %v63 = vadd.f32 %v55, %v62
    %v64 = vadd.s32 %v29, 50
    %65 = vset.pattern.permute.xlu0 2
    %66 = vperm.xlu0 %65, %v64
    %v67 = vpop.permute.xlu0 %66
    %vm68 = vcmp.eq.s32.totalorder %v48, %v67
    %v69 = vsel %vm68, 1, 0
    %v70 = vcvt.s32.f32 %v69
    %v71 = vadd.f32 %v63, %v70
    %vm72 = vcmp.eq.s32.totalorder %v48, 60
    %74 = vset.pattern.permute.xlu0 0
    %75 = vperm.xlu0 %74, %v30
    %v76 = vpop.permute.xlu0 %75
    %v78 = vsel %vm72, %v76, %v71
    %79 = vmatprep.subr.mxu0 0.0
    %80 = vmatpush1.msra.mxu0 %v31
    %81 = vmatprep.subr.mxu0 0.0
    %82 = vmatpush1.msra.mxu0 %v32
    %83 = vmatprep.subr.mxu0 0.0
    %84 = vmatpush1.msra.mxu0 %v33
    %85 = vmatprep.subr.mxu0 0.0
    %86 = vmatpush1.msra.mxu0 %v34
    %87 = vmatprep.subr.mxu0 0.0
    %88 = vmatpush1.msra.mxu0 %v35
    %89 = vmatprep.subr.mxu0 0.0
    %90 = vmatpush1.msra.mxu0 %v36
    %91 = vmatprep.subr.mxu0 0.0
    %92 = vmatpush1.msra.mxu0 %v37
    %93 = vmatprep.subr.mxu0 0.0
    %94 = vmatpush1.msra.mxu0 %v38
    %95 = vmatprep.subr.mxu0 0.0
    %96 = vmatpush1.msra.mxu0 %v39
    %97 = vmatprep.subr.mxu0 0.0
    %98 = vmatpush1.msra.mxu0 %v40
    %99 = vmatprep.subr.mxu0 0.0
    %100 = vmatpush1.msra.mxu0 %v41
    %101 = vmatprep.subr.mxu0 0.0
    %102 = vmatpush1.msra.mxu0 %v42
    %103 = vmatprep.subr.mxu0 0.0
    %104 = vmatpush1.msra.mxu0 %v43
    %105 = vmatprep.subr.mxu0 0.0
    %106 = vmatpush1.msra.mxu0 %v44
    %107 = vmatprep.subr.mxu0 0.0
    %108 = vmatpush1.msra.mxu0 %v45
    %109 = vmatprep.subr.mxu0 0.0
    %110 = vmatpush1.msra.mxu0 %v46
    %111 = vmatprep.subr.mxu0 0.0
    %112 = vmatpush1.msra.mxu0 0.0
    %113 = vmatprep.subr.mxu0 0.0
    %114 = vmatpush1.msra.mxu0 0.0
    %115 = vmatprep.subr.mxu0 0.0
    %116 = vmatpush1.msra.mxu0 0.0
    %117 = vmatprep.subr.mxu0 0.0
    %118 = vmatpush1.msra.mxu0 0.0
    %119 = vmatprep.subr.mxu0 0.0
    %120 = vmatpush1.msra.mxu0 0.0
    %121 = vmatprep.subr.mxu0 0.0
    %122 = vmatpush1.msra.mxu0 0.0
    %123 = vmatprep.subr.mxu0 0.0
    %124 = vmatpush1.msra.mxu0 0.0
    %125 = vmatprep.subr.mxu0 0.0
    %126 = vmatpush1.msra.mxu0 0.0
    %127 = vmatprep.subr.mxu0 0.0
    %128 = vmatpush1.msra.mxu0 0.0
    %129 = vmatprep.subr.mxu0 0.0
    %130 = vmatpush1.msra.mxu0 0.0
    %131 = vmatprep.subr.mxu0 0.0
    %132 = vmatpush1.msra.mxu0 0.0
    %133 = vmatprep.subr.mxu0 0.0
    %134 = vmatpush1.msra.mxu0 0.0
    %135 = vmatprep.subr.mxu0 0.0
    %136 = vmatpush1.msra.mxu0 0.0
    %137 = vmatprep.subr.mxu0 0.0
    %138 = vmatpush1.msra.mxu0 0.0
    %139 = vmatprep.subr.mxu0 0.0
    %140 = vmatpush1.msra.mxu0 0.0
    %141 = vmatprep.subr.mxu0 0.0
    %142 = vmatpush1.msra.mxu0 0.0
    %143 = vmatprep.mubr.f32.mxu0 0.0
    %144 = vmatmul.mubr.f32.gmra.mrb[0].mxu0 %v78
    %v145 = vpop.f32.mrb[0].mxu0
    %v146 = vadd.f32 0.0, %v145
    %v147 = vpop.f32.mrb[0].mxu0
    %148 = vdwg.mxu0
    %149 = vst [vmem:[#allocation5] sm:$0xff] %v146
    // Predicated region
    $region18: #{tpu_custom_call.1} parent=1 // pred_check
      _
    $region19: #{tpu_custom_call.1} parent=1 // pred_check_branch
      %151 = sbr.rel (0) target = $region21
    $region20: #{tpu_custom_call.1} parent=1 // pred_region
      %s153 = ssub.s32 128, 128
      %154 = vsyncadd [#allocation4], %s153
      %s156 = sshll.u32 [#allocation5], 4
      %s157 = int_to_ptr.vmem [resolvable:$true] %s156
      %159 = dma.vmem_to_hbm [thread:$0]  %s157, 128, %s3, [#allocation4]
    $region21: #{tpu_custom_call.1} parent=1 // pred_fallthru
      _
    // Predicated region
    $region22: #{tpu_custom_call.1} parent=1 // pred_check
      _
    $region23: #{tpu_custom_call.1} parent=1 // pred_check_branch
      %161 = sbr.rel (0) target = $region25
    $region24: #{tpu_custom_call.1} parent=1 // pred_region
      %162 = dma.done [#allocation4], 128
    $region25: #{tpu_custom_call.1} parent=1 // pred_fallthru
      _
    %163 = vsyncpa [#allocation3], 1
    %164 = vsyncpa [#allocation4], 1

</llo_original>
